<compile_context>
chip_gen: v5e
topology: v5e:2x2
jax: 0.10.0
libtpu: 0.0.40
codegen_flags: <defaults>
</compile_context>

<pallas_src>
import functools

import jax
import jax.numpy as jnp
from jax.experimental import pallas as pl
from jax.experimental.pallas import tpu as pltpu

KERNEL_SIZE = 5                            # must be odd so output length == L
_LANE = 128
_FALLBACK_VMEM_BYTES = 64 * 1024 * 1024    # conservative (v7x-sized) fallback


def _decomp_kernel(x_ref, res_ref, mean_ref, *, kernel_size):
    # x_ref:    (Bt, L, C)  input block (the only HBM read)
    # res_ref:  (Bt, L, C)  seasonal residual output
    # mean_ref: (Bt, L, C)  trend (moving mean) output
    Bt, L, C = x_ref.shape
    pad = (kernel_size - 1) // 2
    n_rows = Bt * L

    x3 = x_ref[...].astype(jnp.float32)                       # single load
    # Hoisted once (JAX does not CSE broadcast_in_dim inside loops).
    first3 = jnp.broadcast_to(x3[:, 0:1, :], (Bt, L, C))      # x[b, 0, :]
    last3 = jnp.broadcast_to(x3[:, L - 1:L, :], (Bt, L, C))   # x[b, L-1, :]
    t3 = jax.lax.broadcasted_iota(jnp.int32, (Bt, L, C), 1)   # local time idx

    # 2-D flattening: one sublane rotation on (Bt*L, C) covers every batch
    # row.  The circular wrap mixes neighbouring batches only at the local
    # positions t >= L-d / t < d, which are exactly the rows the
    # edge-replication masks below overwrite, so the result equals a
    # per-batch roll.
    x2 = x3.reshape(n_rows, C)
    first2 = first3.reshape(n_rows, C)
    last2 = last3.reshape(n_rows, C)
    t2 = t3.reshape(n_rows, C)

    acc = x2                                                   # d = 0 window
    for d in range(1, pad + 1):                                # static, unrolled
        fwd = pltpu.roll(x2, shift=(n_rows - d) % n_rows, axis=0)  # -> x[t + d]
        bwd = pltpu.roll(x2, shift=d % n_rows, axis=0)             # -> x[t - d]
        acc = acc + jnp.where(t2 >= L - d, last2, fwd)   # clamp tail -> x[L-1]
        acc = acc + jnp.where(t2 < d, first2, bwd)       # clamp head -> x[0]

    mean2 = acc * (1.0 / kernel_size)
    mean_ref[...] = mean2.reshape(Bt, L, C).astype(mean_ref.dtype)
    res_ref[...] = (x2 - mean2).reshape(Bt, L, C).astype(res_ref.dtype)


def _vmem_capacity_bytes():
    try:
        return int(pltpu.get_tpu_info().vmem_capacity_bytes)
    except Exception:
        return _FALLBACK_VMEM_BYTES


def _tensorcores_per_chip():
    # v7x is the only generation with 2 TensorCores per chip.
    try:
        kind = jax.devices()[0].device_kind.lower()
    except Exception:
        return 1
    return 2 if "v7" in kind else 1


def _pick_block_batch(B, L, C, itemsize, vmem_budget, num_tc):
    """Largest batch-block whose double-buffered working set fits the budget;
    only the 2-TensorCore v7x enforces >= num_tc grid steps."""
    # 2x input + 2x each of the two outputs (double-buffered) plus ~8 live f32
    # register intermediates per element for the in-register window sum.
    per_batch = L * C * (6 * itemsize + 8 * 4)
    max_bt = max(1, int(vmem_budget) // max(1, per_batch))
    if num_tc >= 2 and B >= num_tc:
        max_bt = min(max_bt, max(1, B // num_tc))   # keep both TCs busy
    bt = max(1, min(B, max_bt))
    # Prefer a divisor of B (no ragged tail block) if one is within 2x of the cap.
    for cand in range(bt, 0, -1):
        if B % cand == 0:
            if 2 * cand >= bt:
                return cand
            break
    return bt   # ragged tail handled via pl.cdiv + Pallas-masked OOB block


@functools.partial(jax.jit, static_argnames=("kernel_size",))
def series_decomp(x, kernel_size=KERNEL_SIZE):
    """x: (B, L, C) -> (residual, moving_mean), both (B, L, C)."""
    if kernel_size % 2 != 1:
        raise ValueError("kernel_size must be odd so the output length equals L")
    B, L, C = x.shape

    # Lane-dense channels: pad C up to a multiple of 128 so all loads/stores
    # are unmasked full-lane accesses.  The decomposition is independent per
    # channel, so zero padding is exact and sliced away afterwards.
    Cp = -(-C // _LANE) * _LANE
    x_in = x if Cp == C else jnp.pad(x, ((0, 0), (0, 0), (0, Cp - C)))

    vmem_cap = _vmem_capacity_bytes()
    vmem_limit = max(16 * 1024 * 1024, min(vmem_cap // 2, 64 * 1024 * 1024))
    vmem_budget = vmem_limit // 2
    num_tc = _tensorcores_per_chip()

    Bt = _pick_block_batch(B, L, Cp, x.dtype.itemsize, vmem_budget, num_tc)
    grid_b = pl.cdiv(B, Bt)

    # v7x: if batch alone cannot feed both TensorCores, split the channel dim
    # into a second lane-aligned "parallel" grid axis.
    grid_c, Ct = 1, Cp
    if num_tc >= 2 and grid_b < num_tc and Cp % (_LANE * num_tc) == 0:
        grid_c, Ct = num_tc, Cp // num_tc

    kernel = functools.partial(_decomp_kernel, kernel_size=kernel_size)
    bspec = pl.BlockSpec((Bt, L, Ct), lambda b, c: (b, 0, c))
    res, mean = pl.pallas_call(
        kernel,
        out_shape=(
            jax.ShapeDtypeStruct((B, L, Cp), x.dtype),
            jax.ShapeDtypeStruct((B, L, Cp), x.dtype),
        ),
        grid_spec=pltpu.PrefetchScalarGridSpec(
            num_scalar_prefetch=0,
            grid=(grid_b, grid_c),
            in_specs=[bspec],
            out_specs=[bspec, bspec],
        ),
        compiler_params=pltpu.CompilerParams(
            dimension_semantics=("parallel", "parallel"),
            vmem_limit_bytes=vmem_limit,
        ),
    )(x_in)
    if Cp != C:
        res, mean = res[:, :, :C], mean[:, :, :C]
    return res, mean


def _reference(x, kernel_size):
    # Pure-JAX reference mirroring the PyTorch-style decomposition exactly.
    pad = (kernel_size - 1) // 2
    front = jnp.repeat(x[:, 0:1, :], pad, axis=1)
    end = jnp.repeat(x[:, -1:, :], pad, axis=1)
    xp = jnp.concatenate([front, x, end], axis=1)
    L = x.shape[1]
    windows = jnp.stack([xp[:, j:j + L, :] for j in range(kernel_size)], axis=0)
    mean = jnp.mean(windows, axis=0)
    return x - mean, mean


if __name__ == "__main__":
    key = jax.random.PRNGKey(0)
    # L matches the spec's first window length (step[0] = 24); C = 128 keeps
    # the lane dim dense so all loads/stores are unmasked.
    B, L, C = 4, 24, 128
    x = jax.random.normal(key, (B, L, C), dtype=jnp.float32)

    res, mean = series_decomp(x, kernel_size=KERNEL_SIZE)
    jax.block_until_ready((res, mean))

    res_ref, mean_ref = _reference(x, KERNEL_SIZE)
    assert res.shape == (B, L, C) and mean.shape == (B, L, C)
    assert jnp.allclose(mean, mean_ref, atol=1e-5), "moving mean mismatch"
    assert jnp.allclose(res, res_ref, atol=1e-5), "residual mismatch"

    print("KERNEL_OK")
</pallas_src>

<mosaic_0001>
module attributes {stable_mosaic.version = 11 : i64} {
  func.func @_decomp_kernel(%arg0: i32, %arg1: i32, %arg2: memref<4x24x128xf32, #tpu.memory_space<vmem>>, %arg3: memref<4x24x128xf32, #tpu.memory_space<vmem>>, %arg4: memref<4x24x128xf32, #tpu.memory_space<vmem>>) attributes {dimension_semantics = [#tpu.dimension_semantics<parallel>, #tpu.dimension_semantics<parallel>], iteration_bounds = array<i64: 1, 1>, scalar_prefetch = 0 : i64, scratch_operands = 0 : i64, tpu.core_type = #tpu.core_type<tc>, window_params = [{transform_indices = @transform_0, window_bounds = array<i64: 4, 24, 128>}, {transform_indices = @transform_1, window_bounds = array<i64: 4, 24, 128>}, {transform_indices = @transform_2, window_bounds = array<i64: 4, 24, 128>}]} {
    %c0 = arith.constant 0 : index
    %c0_0 = arith.constant 0 : index
    %c0_1 = arith.constant 0 : index
    %0 = vector.load %arg2[%c0, %c0_0, %c0_1] : memref<4x24x128xf32, #tpu.memory_space<vmem>>, vector<4x24x128xf32>
    %1 = vector.extract_strided_slice %0 {offsets = [0, 0, 0], sizes = [4, 1, 128], strides = [1, 1, 1]} : vector<4x24x128xf32> to vector<4x1x128xf32>
    %2 = vector.shape_cast %1 : vector<4x1x128xf32> to vector<4x1x128xf32>
    %3 = vector.broadcast %2 : vector<4x1x128xf32> to vector<4x24x128xf32>
    %4 = vector.extract_strided_slice %0 {offsets = [0, 23, 0], sizes = [4, 1, 128], strides = [1, 1, 1]} : vector<4x24x128xf32> to vector<4x1x128xf32>
    %5 = vector.shape_cast %4 : vector<4x1x128xf32> to vector<4x1x128xf32>
    %6 = vector.broadcast %5 : vector<4x1x128xf32> to vector<4x24x128xf32>
    %7 = tpu.iota {dimensions = array<i32: 1>} : vector<4x24x128xi32>
    %8 = vector.shape_cast %0 : vector<4x24x128xf32> to vector<96x128xf32>
    %9 = vector.shape_cast %3 : vector<4x24x128xf32> to vector<96x128xf32>
    %10 = vector.shape_cast %6 : vector<4x24x128xf32> to vector<96x128xf32>
    %11 = vector.shape_cast %7 : vector<4x24x128xi32> to vector<96x128xi32>
    %c95_i32 = arith.constant 95 : i32
    %12 = tpu.dynamic_rotate %8 by %c95_i32 dim 0 : vector<96x128xf32>, i32 -> vector<96x128xf32>
    %c1_i32 = arith.constant 1 : i32
    %13 = tpu.dynamic_rotate %8 by %c1_i32 dim 0 : vector<96x128xf32>, i32 -> vector<96x128xf32>
    %c23_i32 = arith.constant 23 : i32
    %14 = vector.broadcast %c23_i32 : i32 to vector<96x128xi32>
    %15 = arith.cmpi sge, %11, %14 : vector<96x128xi32>
    %16 = arith.select %15, %10, %12 : vector<96x128xi1>, vector<96x128xf32>
    %17 = arith.addf %8, %16 : vector<96x128xf32>
    %c1_i32_2 = arith.constant 1 : i32
    %18 = vector.broadcast %c1_i32_2 : i32 to vector<96x128xi32>
    %19 = arith.cmpi slt, %11, %18 : vector<96x128xi32>
    %20 = arith.select %19, %9, %13 : vector<96x128xi1>, vector<96x128xf32>
    %21 = arith.addf %17, %20 : vector<96x128xf32>
    %c94_i32 = arith.constant 94 : i32
    %22 = tpu.dynamic_rotate %8 by %c94_i32 dim 0 : vector<96x128xf32>, i32 -> vector<96x128xf32>
    %c2_i32 = arith.constant 2 : i32
    %23 = tpu.dynamic_rotate %8 by %c2_i32 dim 0 : vector<96x128xf32>, i32 -> vector<96x128xf32>
    %c22_i32 = arith.constant 22 : i32
    %24 = vector.broadcast %c22_i32 : i32 to vector<96x128xi32>
    %25 = arith.cmpi sge, %11, %24 : vector<96x128xi32>
    %26 = arith.select %25, %10, %22 : vector<96x128xi1>, vector<96x128xf32>
    %27 = arith.addf %21, %26 : vector<96x128xf32>
    %c2_i32_3 = arith.constant 2 : i32
    %28 = vector.broadcast %c2_i32_3 : i32 to vector<96x128xi32>
    %29 = arith.cmpi slt, %11, %28 : vector<96x128xi32>
    %30 = arith.select %29, %9, %23 : vector<96x128xi1>, vector<96x128xf32>
    %31 = arith.addf %27, %30 : vector<96x128xf32>
    %cst = arith.constant 2.000000e-01 : f32
    %32 = vector.broadcast %cst : f32 to vector<96x128xf32>
    %33 = arith.mulf %31, %32 : vector<96x128xf32>
    %34 = vector.shape_cast %33 : vector<96x128xf32> to vector<4x24x128xf32>
    %c0_4 = arith.constant 0 : index
    %c0_5 = arith.constant 0 : index
    %c0_6 = arith.constant 0 : index
    %35 = vector.load %arg4[%c0_4, %c0_5, %c0_6] : memref<4x24x128xf32, #tpu.memory_space<vmem>>, vector<4x24x128xf32>
    tpu.vector_store %arg4[%c0_4, %c0_5, %c0_6], %34 {strides = array<i32>} : memref<4x24x128xf32, #tpu.memory_space<vmem>>, vector<4x24x128xf32>,
    %36 = arith.subf %8, %33 : vector<96x128xf32>
    %37 = vector.shape_cast %36 : vector<96x128xf32> to vector<4x24x128xf32>
    %c0_7 = arith.constant 0 : index
    %c0_8 = arith.constant 0 : index
    %c0_9 = arith.constant 0 : index
    %38 = vector.load %arg3[%c0_7, %c0_8, %c0_9] : memref<4x24x128xf32, #tpu.memory_space<vmem>>, vector<4x24x128xf32>
    tpu.vector_store %arg3[%c0_7, %c0_8, %c0_9], %37 {strides = array<i32>} : memref<4x24x128xf32, #tpu.memory_space<vmem>>, vector<4x24x128xf32>,
    return
  }
  func.func @transform_0(%arg0: i32, %arg1: i32) -> (i32, i32, i32) {
    %c0_i32 = arith.constant 0 : i32
    %c0_i32_0 = arith.constant 0 : i32
    return %arg0, %c0_i32, %arg1 : i32, i32, i32
  }
  func.func @transform_1(%arg0: i32, %arg1: i32) -> (i32, i32, i32) {
    %c0_i32 = arith.constant 0 : i32
    %c0_i32_0 = arith.constant 0 : i32
    return %arg0, %c0_i32, %arg1 : i32, i32, i32
  }
  func.func @transform_2(%arg0: i32, %arg1: i32) -> (i32, i32, i32) {
    %c0_i32 = arith.constant 0 : i32
    %c0_i32_0 = arith.constant 0 : i32
    return %arg0, %c0_i32, %arg1 : i32, i32, i32
  }
}

</mosaic_0001>

<llo_original>
// kernel: series_decomp.1
$region0: #{series_decomp.1}
  #allocation0 [shape = 'u32[]', space=smem, size = 0x4, offset = 0x4, fixed_abs, tag = 'smem constant byte address 0x4 - core index']
  #allocation1 [shape = 'u32[72,128]{1,0:T(1,128)}', space=vmem, size = 0x9000, scoped, tag = 'internal scratch']
  %s0 = inlined_call_operand.hbm [shape: f32[4,24,128], index: 0, kind: input, shape index: {}]
  %s1 = inlined_call_operand.hbm [shape: f32[4,24,128], index: 1, kind: output, shape index: {0}]
  %s2 = inlined_call_operand.hbm [shape: f32[4,24,128], index: 2, kind: output, shape index: {1}]
  %3 = xla_tuple %s1, %s2
  %s4 = sld [smem:[#allocation0]]
  $region26: #{series_decomp.1} parent=0
    _
  %s6 = ssub.s32 1, %s4
  %s7 = scalar_select 0, %s6, %s4
  $region1: #{series_decomp.1} parent=0
    #allocation2 [shape = 'u8[49152]{0}', space=vmem, size = 0xc000, scoped, tag = 'input window, operand 0, single buffered']
    #allocation3 [shape = 's32[1]{0}', space=sflag, size = 0x4, scoped, tag = 'scoped memory for series_decomp.1']
    #allocation4 [shape = 's32[1]{0}', space=sflag, size = 0x4, scoped, tag = 'scoped memory for series_decomp.1']
    #allocation5 [shape = 'u8[49152]{0}', space=vmem, size = 0xc000, scoped, tag = 'output window, operand 0, single buffered']
    #allocation6 [shape = 'u8[49152]{0}', space=vmem, size = 0xc000, scoped, tag = 'output window, operand 1, single buffered']
    #allocation7 [shape = 's32[1]{0}', space=sflag, size = 0x4, scoped, tag = 'scoped memory for series_decomp.1']
    %8 = vsyncpa [#allocation3], 0
    %9 = vsyncpa [#allocation4], 0
    %10 = vsyncpa [#allocation7], 0
    // Predicated region
    $region2: #{series_decomp.1} parent=1 // pred_check
      _
    $region3: #{series_decomp.1} parent=1 // pred_check_branch
      %12 = sbr.rel (0) target = $region5
    $region4: #{series_decomp.1} parent=1 // pred_region
      %14 = vsyncadd [#allocation3], 0
      %s15 = sshll.u32 %s0, 4
      %s16 = int_to_ptr.hbm [resolvable:$true] %s15
      %s17 = sshll.u32 [#allocation2], 4
      %s18 = int_to_ptr.vmem [resolvable:$true] %s17
      %23 = dma.hbm_to_vmem [thread:$0]  %s16, 1536, %s18, [#allocation3], 128, 128, 8
    $region5: #{series_decomp.1} parent=1 // pred_fallthru
      _
    // Predicated region
    $region6: #{series_decomp.1} parent=1 // pred_check
      _
    $region7: #{series_decomp.1} parent=1 // pred_check_branch
      %25 = sbr.rel (0) target = $region9
    $region8: #{series_decomp.1} parent=1 // pred_region
      %27 = dma.done [#allocation3], 1536
    $region9: #{series_decomp.1} parent=1 // pred_fallthru
      _
    %v28 = vld [vmem:[#allocation2] sm:$0xff]
    %v29 = vld [vmem:[#allocation2 + $0x8] sm:$0xff]
    %v30 = vld [vmem:[#allocation2 + $0x10] sm:$0xff]
    %v31 = vld [vmem:[#allocation2 + $0x18] sm:$0xff]
    %v32 = vld [vmem:[#allocation2 + $0x20] sm:$0xff]
    %v33 = vld [vmem:[#allocation2 + $0x28] sm:$0xff]
    %v34 = vld [vmem:[#allocation2 + $0x30] sm:$0xff]
    %v35 = vld [vmem:[#allocation2 + $0x38] sm:$0xff]
    %v36 = vld [vmem:[#allocation2 + $0x40] sm:$0xff]
    %v37 = vld [vmem:[#allocation2 + $0x48] sm:$0xff]
    %v38 = vld [vmem:[#allocation2 + $0x50] sm:$0xff]
    %v39 = vld [vmem:[#allocation2 + $0x58] sm:$0xff]
    %v40 = vperm.slane %v28, 0
    %v41 = vperm.slane %v31, 0
    %v42 = vperm.slane %v34, 0
    %v43 = vperm.slane %v37, 0
    %v44 = vperm.slane %v30, 7
    %v45 = vperm.slane %v33, 7
    %v46 = vperm.slane %v36, 7
    %v47 = vperm.slane %v39, 7
    %v48 = vlaneseq
    %v49 = vshrl.u32 %v48, 7
    %v50 = vadd.s32 %v49, 8
    %v51 = vadd.s32 %v49, 16
    %v52 = vrot.slane %v28, 1
    %v53 = vrot.slane %v29, 1
    %v54 = vrot.slane %v30, 1
    %v55 = vrot.slane %v31, 1
    %v56 = vrot.slane %v32, 1
    %v57 = vrot.slane %v33, 1
    %v58 = vrot.slane %v34, 1
    %v59 = vrot.slane %v35, 1
    %v60 = vrot.slane %v36, 1
    %v61 = vrot.slane %v37, 1
    %v62 = vrot.slane %v38, 1
    %v63 = vrot.slane %v39, 1
    %vm64 = vcmp.lt.s32.totalorder %v49, 7
    %v65 = vsel %vm64, %v62, %v63
    %v66 = vsel %vm64, %v61, %v62
    %v67 = vsel %vm64, %v60, %v61
    %v68 = vsel %vm64, %v59, %v60
    %v69 = vsel %vm64, %v58, %v59
    %v70 = vsel %vm64, %v57, %v58
    %v71 = vsel %vm64, %v56, %v57
    %v72 = vsel %vm64, %v55, %v56
    %v73 = vsel %vm64, %v54, %v55
    %v74 = vsel %vm64, %v53, %v54
    %v75 = vsel %vm64, %v52, %v53
    %v76 = vsel %vm64, %v63, %v52
    %v77 = vrot.slane %v28, 7
    %v78 = vrot.slane %v29, 7
    %v79 = vrot.slane %v30, 7
    %v80 = vrot.slane %v31, 7
    %v81 = vrot.slane %v32, 7
    %v82 = vrot.slane %v33, 7
    %v83 = vrot.slane %v34, 7
    %v84 = vrot.slane %v35, 7
    %v85 = vrot.slane %v36, 7
    %v86 = vrot.slane %v37, 7
    %v87 = vrot.slane %v38, 7
    %v88 = vrot.slane %v39, 7
    %vm89 = vcmp.lt.s32.totalorder %v49, 1
    %v90 = vsel %vm89, %v87, %v88
    %v91 = vsel %vm89, %v86, %v87
    %v92 = vsel %vm89, %v85, %v86
    %v93 = vsel %vm89, %v84, %v85
    %v94 = vsel %vm89, %v83, %v84
    %v95 = vsel %vm89, %v82, %v83
    %v96 = vsel %vm89, %v81, %v82
    %v97 = vsel %vm89, %v80, %v81
    %v98 = vsel %vm89, %v79, %v80
    %v99 = vsel %vm89, %v78, %v79
    %v100 = vsel %vm89, %v77, %v78
    %v101 = vsel %vm89, %v88, %v77
    %vm102 = vcmp.ge.s32.totalorder %v49, 23
    %vm103 = vcmp.ge.s32.totalorder %v50, 23
    %vm104 = vcmp.ge.s32.totalorder %v51, 23
    %v105 = vsel %vm102, %v44, %v75
    %v106 = vsel %vm103, %v44, %v74
    %v107 = vsel %vm104, %v44, %v73
    %v108 = vsel %vm102, %v45, %v72
    %v109 = vsel %vm103, %v45, %v71
    %v110 = vsel %vm104, %v45, %v70
    %v111 = vsel %vm102, %v46, %v69
    %v112 = vsel %vm103, %v46, %v68
    %v113 = vsel %vm104, %v46, %v67
    %v114 = vsel %vm102, %v47, %v66
    %v115 = vsel %vm103, %v47, %v65
    %v116 = vsel %vm104, %v47, %v76
    %v117 = vadd.f32 %v28, %v105
    %v118 = vadd.f32 %v29, %v106
    %v119 = vadd.f32 %v30, %v107
    %v120 = vadd.f32 %v31, %v108
    %v121 = vadd.f32 %v32, %v109
    %v122 = vadd.f32 %v33, %v110
    %v123 = vadd.f32 %v34, %v111
    %v124 = vadd.f32 %v35, %v112
    %v125 = vadd.f32 %v36, %v113
    %v126 = vadd.f32 %v37, %v114
    %v127 = vadd.f32 %v38, %v115
    %v128 = vadd.f32 %v39, %v116
    %vm129 = vcmp.lt.s32.totalorder %v50, 1
    %vm130 = vcmp.lt.s32.totalorder %v51, 1
    %v131 = vsel %vm89, %v40, %v101
    %v132 = vsel %vm129, %v40, %v100
    %v133 = vsel %vm130, %v40, %v99
    %v134 = vsel %vm89, %v41, %v98
    %v135 = vsel %vm129, %v41, %v97
    %v136 = vsel %vm130, %v41, %v96
    %v137 = vsel %vm89, %v42, %v95
    %v138 = vsel %vm129, %v42, %v94
    %v139 = vsel %vm130, %v42, %v93
    %v140 = vsel %vm89, %v43, %v92
    %v141 = vsel %vm129, %v43, %v91
    %v142 = vsel %vm130, %v43, %v90
    %v143 = vadd.f32 %v117, %v131
    %v144 = vadd.f32 %v118, %v132
    %v145 = vadd.f32 %v119, %v133
    %v146 = vadd.f32 %v120, %v134
    %v147 = vadd.f32 %v121, %v135
    %v148 = vadd.f32 %v122, %v136
    %v149 = vadd.f32 %v123, %v137
    %v150 = vadd.f32 %v124, %v138
    %v151 = vadd.f32 %v125, %v139
    %v152 = vadd.f32 %v126, %v140
    %v153 = vadd.f32 %v127, %v141
    %v154 = vadd.f32 %v128, %v142
    %v155 = vrot.slane %v28, 2
    %v156 = vrot.slane %v29, 2
    %v157 = vrot.slane %v30, 2
    %v158 = vrot.slane %v31, 2
    %v159 = vrot.slane %v32, 2
    %v160 = vrot.slane %v33, 2
    %v161 = vrot.slane %v34, 2
    %v162 = vrot.slane %v35, 2
    %v163 = vrot.slane %v36, 2
    %v164 = vrot.slane %v37, 2
    %v165 = vrot.slane %v38, 2
    %v166 = vrot.slane %v39, 2
    %vm167 = vcmp.lt.s32.totalorder %v49, 6
    %v168 = vsel %vm167, %v165, %v166
    %v169 = vsel %vm167, %v164, %v165
    %v170 = vsel %vm167, %v163, %v164
    %v171 = vsel %vm167, %v162, %v163
    %v172 = vsel %vm167, %v161, %v162
    %v173 = vsel %vm167, %v160, %v161
    %v174 = vsel %vm167, %v159, %v160
    %v175 = vsel %vm167, %v158, %v159
    %v176 = vsel %vm167, %v157, %v158
    %v177 = vsel %vm167, %v156, %v157
    %v178 = vsel %vm167, %v155, %v156
    %v179 = vsel %vm167, %v166, %v155
    %v180 = vrot.slane %v28, 6
    %v181 = vrot.slane %v29, 6
    %v182 = vrot.slane %v30, 6
    %v183 = vrot.slane %v31, 6
    %v184 = vrot.slane %v32, 6
    %v185 = vrot.slane %v33, 6
    %v186 = vrot.slane %v34, 6
    %v187 = vrot.slane %v35, 6
    %v188 = vrot.slane %v36, 6
    %v189 = vrot.slane %v37, 6
    %v190 = vrot.slane %v38, 6
    %v191 = vrot.slane %v39, 6
    %vm192 = vcmp.lt.s32.totalorder %v49, 2
    %v193 = vsel %vm192, %v190, %v191
    %v194 = vsel %vm192, %v189, %v190
    %v195 = vsel %vm192, %v188, %v189
    %v196 = vsel %vm192, %v187, %v188
    %v197 = vsel %vm192, %v186, %v187
    %v198 = vsel %vm192, %v185, %v186
    %v199 = vsel %vm192, %v184, %v185
    %v200 = vsel %vm192, %v183, %v184
    %v201 = vsel %vm192, %v182, %v183
    %v202 = vsel %vm192, %v181, %v182
    %v203 = vsel %vm192, %v180, %v181
    %v204 = vsel %vm192, %v191, %v180
    %vm205 = vcmp.ge.s32.totalorder %v49, 22
    %vm206 = vcmp.ge.s32.totalorder %v50, 22
    %vm207 = vcmp.ge.s32.totalorder %v51, 22
    %v208 = vsel %vm205, %v44, %v178
    %v209 = vsel %vm206, %v44, %v177
    %v210 = vsel %vm207, %v44, %v176
    %v211 = vsel %vm205, %v45, %v175
    %v212 = vsel %vm206, %v45, %v174
    %v213 = vsel %vm207, %v45, %v173
    %v214 = vsel %vm205, %v46, %v172
    %v215 = vsel %vm206, %v46, %v171
    %v216 = vsel %vm207, %v46, %v170
    %v217 = vsel %vm205, %v47, %v169
    %v218 = vsel %vm206, %v47, %v168
    %v219 = vsel %vm207, %v47, %v179
    %v220 = vadd.f32 %v143, %v208
    %v221 = vadd.f32 %v144, %v209
    %v222 = vadd.f32 %v145, %v210
    %v223 = vadd.f32 %v146, %v211
    %v224 = vadd.f32 %v147, %v212
    %v225 = vadd.f32 %v148, %v213
    %v226 = vadd.f32 %v149, %v214
    %v227 = vadd.f32 %v150, %v215
    %v228 = vadd.f32 %v151, %v216
    %v229 = vadd.f32 %v152, %v217
    %v230 = vadd.f32 %v153, %v218
    %v231 = vadd.f32 %v154, %v219
    %vm232 = vcmp.lt.s32.totalorder %v50, 2
    %vm233 = vcmp.lt.s32.totalorder %v51, 2
    %v234 = vsel %vm192, %v40, %v204
    %v235 = vsel %vm232, %v40, %v203
    %v236 = vsel %vm233, %v40, %v202
    %v237 = vsel %vm192, %v41, %v201
    %v238 = vsel %vm232, %v41, %v200
    %v239 = vsel %vm233, %v41, %v199
    %v240 = vsel %vm192, %v42, %v198
    %v241 = vsel %vm232, %v42, %v197
    %v242 = vsel %vm233, %v42, %v196
    %v243 = vsel %vm192, %v43, %v195
    %v244 = vsel %vm232, %v43, %v194
    %v245 = vsel %vm233, %v43, %v193
    %v246 = vadd.f32 %v220, %v234
    %v247 = vadd.f32 %v221, %v235
    %v248 = vadd.f32 %v222, %v236
    %v249 = vadd.f32 %v223, %v237
    %v250 = vadd.f32 %v224, %v238
    %v251 = vadd.f32 %v225, %v239
    %v252 = vadd.f32 %v226, %v240
    %v253 = vadd.f32 %v227, %v241
    %v254 = vadd.f32 %v228, %v242
    %v255 = vadd.f32 %v229, %v243
    %v256 = vadd.f32 %v230, %v244
    %v257 = vadd.f32 %v231, %v245
    %v258 = vmul.f32 %v246, 0.2
    %v259 = vmul.f32 %v247, 0.2
    %v260 = vmul.f32 %v248, 0.2
    %v261 = vmul.f32 %v249, 0.2
    %v262 = vmul.f32 %v250, 0.2
    %v263 = vmul.f32 %v251, 0.2
    %v264 = vmul.f32 %v252, 0.2
    %v265 = vmul.f32 %v253, 0.2
    %v266 = vmul.f32 %v254, 0.2
    %v267 = vmul.f32 %v255, 0.2
    %v268 = vmul.f32 %v256, 0.2
    %v269 = vmul.f32 %v257, 0.2
    %270 = vst [vmem:[#allocation6] sm:$0xff] %v258
    %271 = vst [vmem:[#allocation6 + $0x8] sm:$0xff] %v259
    %272 = vst [vmem:[#allocation6 + $0x10] sm:$0xff] %v260
    %273 = vst [vmem:[#allocation6 + $0x18] sm:$0xff] %v261
    %274 = vst [vmem:[#allocation6 + $0x20] sm:$0xff] %v262
    %275 = vst [vmem:[#allocation6 + $0x28] sm:$0xff] %v263
    %276 = vst [vmem:[#allocation6 + $0x30] sm:$0xff] %v264
    %277 = vst [vmem:[#allocation6 + $0x38] sm:$0xff] %v265
    %278 = vst [vmem:[#allocation6 + $0x40] sm:$0xff] %v266
    %279 = vst [vmem:[#allocation6 + $0x48] sm:$0xff] %v267
    %280 = vst [vmem:[#allocation6 + $0x50] sm:$0xff] %v268
    %281 = vst [vmem:[#allocation6 + $0x58] sm:$0xff] %v269
    %v282 = vsub.f32 %v28, %v258
    %v283 = vsub.f32 %v29, %v259
    %v284 = vsub.f32 %v30, %v260
    %v285 = vsub.f32 %v31, %v261
    %v286 = vsub.f32 %v32, %v262
    %v287 = vsub.f32 %v33, %v263
    %v288 = vsub.f32 %v34, %v264
    %v289 = vsub.f32 %v35, %v265
    %v290 = vsub.f32 %v36, %v266
    %v291 = vsub.f32 %v37, %v267
    %v292 = vsub.f32 %v38, %v268
    %v293 = vsub.f32 %v39, %v269
    %294 = vst [vmem:[#allocation5] sm:$0xff] %v282
    %295 = vst [vmem:[#allocation5 + $0x8] sm:$0xff] %v283
    %296 = vst [vmem:[#allocation5 + $0x10] sm:$0xff] %v284
    %297 = vst [vmem:[#allocation5 + $0x18] sm:$0xff] %v285
    %298 = vst [vmem:[#allocation5 + $0x20] sm:$0xff] %v286
    %299 = vst [vmem:[#allocation5 + $0x28] sm:$0xff] %v287
    %300 = vst [vmem:[#allocation5 + $0x30] sm:$0xff] %v288
    %301 = vst [vmem:[#allocation5 + $0x38] sm:$0xff] %v289
    %302 = vst [vmem:[#allocation5 + $0x40] sm:$0xff] %v290
    %303 = vst [vmem:[#allocation5 + $0x48] sm:$0xff] %v291
    %304 = vst [vmem:[#allocation5 + $0x50] sm:$0xff] %v292
    %305 = vst [vmem:[#allocation5 + $0x58] sm:$0xff] %v293
    // Predicated region
    $region10: #{series_decomp.1} parent=1 // pred_check
      _
    $region11: #{series_decomp.1} parent=1 // pred_check_branch
      %307 = sbr.rel (0) target = $region13
    $region12: #{series_decomp.1} parent=1 // pred_region
      %309 = vsyncadd [#allocation4], 0
      %s310 = sshll.u32 [#allocation5], 4
      %s311 = int_to_ptr.vmem [resolvable:$true] %s310
      %s312 = sshll.u32 %s1, 4
      %s313 = int_to_ptr.hbm [resolvable:$true] %s312
      %318 = dma.vmem_to_hbm [thread:$0]  %s311, 1536, %s313, [#allocation4], 128, 128, 8
    $region13: #{series_decomp.1} parent=1 // pred_fallthru
      _
    // Predicated region
    $region14: #{series_decomp.1} parent=1 // pred_check
      _
    $region15: #{series_decomp.1} parent=1 // pred_check_branch
      %320 = sbr.rel (0) target = $region17
    $region16: #{series_decomp.1} parent=1 // pred_region
      %322 = vsyncadd [#allocation7], 0
      %s323 = sshll.u32 [#allocation6], 4
      %s324 = int_to_ptr.vmem [resolvable:$true] %s323
      %s325 = sshll.u32 %s2, 4
      %s326 = int_to_ptr.hbm [resolvable:$true] %s325
      %331 = dma.vmem_to_hbm [thread:$0]  %s324, 1536, %s326, [#allocation7], 128, 128, 8
    $region17: #{series_decomp.1} parent=1 // pred_fallthru
      _
    // Predicated region
    $region18: #{series_decomp.1} parent=1 // pred_check
      _
    $region19: #{series_decomp.1} parent=1 // pred_check_branch
      %333 = sbr.rel (0) target = $region21
    $region20: #{series_decomp.1} parent=1 // pred_region
      %335 = dma.done [#allocation4], 1536
    $region21: #{series_decomp.1} parent=1 // pred_fallthru
      _
    // Predicated region
    $region22: #{series_decomp.1} parent=1 // pred_check
      _
    $region23: #{series_decomp.1} parent=1 // pred_check_branch
      %337 = sbr.rel (0) target = $region25
    $region24: #{series_decomp.1} parent=1 // pred_region
      %339 = dma.done [#allocation7], 1536
    $region25: #{series_decomp.1} parent=1 // pred_fallthru
      _
    %340 = vsyncpa [#allocation3], 1
    %341 = vsyncpa [#allocation4], 1
    %342 = vsyncpa [#allocation7], 1

</llo_original>
